<compile_context>
chip_gen: v7x
topology: tpu7x:2x2x1
jax: 0.10.0
libtpu: 0.0.40
codegen_flags: <defaults>
</compile_context>

<pallas_src>
import math

import jax
import jax.numpy as jnp
from jax.experimental import pallas as pl
from jax.experimental.pallas import tpu as pltpu


def _round_up(v, m):
    return (v + m - 1) // m * m


def _sublane_multiple(dtype):
    # 8 rows for 32-bit, 16 for bf16/f16, 32 for int8/fp8.
    return max(8, 32 // jnp.dtype(dtype).itemsize)


def _pick_spatial_tile(P, block_p):
    """Pick a lane-dense spatial tile TP (multiple of 128).  Prefer a TP that
    divides P exactly so no padding copy of the patches array is needed."""
    block_p = max(128, block_p - block_p % 128)
    if P % 128 == 0:
        t = min(block_p, P)
        while t >= 128:
            if P % t == 0:
                return t, P               # exact division -> no pad
            t -= 128
    TP = min(block_p, _round_up(P, 128))
    return TP, _round_up(P, TP)


def _equal_conv2d_kernel(p_ref, w_ref, b_ref, o_ref):
    # p_ref: (1, KKCp, TP)  im2col patches tile (lane-dense spatial dim)
    # w_ref: (TO, KKCp)     pre-scaled, repacked weight tile
    # b_ref: (TO, 1)        bias tile (f32)
    # o_ref: (1, TO, TP)    output tile
    acc = jnp.dot(w_ref[...], p_ref[0], preferred_element_type=jnp.float32)
    o_ref[0] = (acc + b_ref[...]).astype(o_ref.dtype)   # single full-tile store


def equal_conv2d(x, weight, bias, *, stride=1, padding=0,
                 compute_dtype=jnp.bfloat16, block_o=512, block_p=1024):
    """EqualConv2d forward: conv2d(x, weight * 1/sqrt(C*K*K), bias, stride, padding).

    GEMM operands are cast to `compute_dtype` (default bf16); accumulation is
    always f32.  Output dtype matches x.dtype.
    """
    N, C, H, W = x.shape
    O, Cw, K, K2 = weight.shape
    assert Cw == C and K2 == K
    assert block_p >= 128, "block_p must be >= 128"
    out_dtype = x.dtype

    scale = 1.0 / math.sqrt(C * K * K)

    # ---- wrapper-side im2col (lane-dense patches) --------------------------
    xp = jnp.pad(x, ((0, 0), (0, 0), (padding, padding), (padding, padding)))
    Hp, Wp = H + 2 * padding, W + 2 * padding
    Ho = (Hp - K) // stride + 1
    Wo = (Wp - K) // stride + 1
    P = Ho * Wo
    KKC = K * K * C

    taps = []
    for kh in range(K):
        for kw in range(K):
            taps.append(jax.lax.slice(
                xp,
                (0, 0, kh, kw),
                (N, C, kh + (Ho - 1) * stride + 1, kw + (Wo - 1) * stride + 1),
                (1, 1, stride, stride)))
    # contraction ordering along K*K*C is (kh, kw, c)
    patches = jnp.stack(taps, axis=1).reshape(N, KKC, P).astype(compute_dtype)

    # ---- tiling -------------------------------------------------------------
    in_sub = _sublane_multiple(compute_dtype)         # second-minor of patches tile
    out_sub = _sublane_multiple(out_dtype)            # second-minor of output tile
    KKCp = _round_up(KKC, in_sub)

    TO = min(_round_up(block_o, out_sub), _round_up(O, out_sub))
    O_pad = _round_up(O, TO)
    TP, P_pad = _pick_spatial_tile(P, block_p)

    in_sz = jnp.dtype(compute_dtype).itemsize
    out_sz = jnp.dtype(out_dtype).itemsize

    def derived_vmem(tp, to):
        # double-buffered patches + weight + output tiles, plus bias tile
        return (2 * (KKCp * tp * in_sz + to * KKCp * in_sz + to * tp * out_sz)
                + 2 * to * 128 * 4)

    VMEM_CAP = 48 * 1024 * 1024          # safe on v7x (64 MiB physical), roomy on v5e/v6e
    while derived_vmem(TP, TO) > VMEM_CAP and TP > 128:
        TP, P_pad = _pick_spatial_tile(P, max(128, TP // 2))

    # ---- padding (only when genuinely ragged) -------------------------------
    if KKCp != KKC or P_pad != P:
        patches = jnp.pad(patches, ((0, 0), (0, KKCp - KKC), (0, P_pad - P)))

    # weight: (O, C, K, K) -> (O, kh, kw, c) -> (O, K*K*C), pre-scaled
    w2 = (weight.astype(jnp.float32) * scale).transpose(0, 2, 3, 1).reshape(O, KKC)
    w2 = jnp.pad(w2, ((0, O_pad - O), (0, KKCp - KKC))).astype(compute_dtype)

    if bias is None:
        b2 = jnp.zeros((O_pad, 1), jnp.float32)
    else:
        b2 = jnp.pad(bias.astype(jnp.float32).reshape(O, 1),
                     ((0, O_pad - O), (0, 0)))

    # ---- grid nesting / residency -------------------------------------------
    o_tiles = O_pad // TO
    p_tiles = P_pad // TP
    weight_bytes = O_pad * KKCp * in_sz
    patch_bytes_per_n = KKCp * P_pad * in_sz
    if o_tiles == 1 or weight_bytes >= patch_bytes_per_n:
        # pi innermost: weight block index constant across the sweep -> weight
        # stays resident, patches streamed exactly once per (n, oi).
        grid = (N, o_tiles, p_tiles)
        p_map = lambda n, oi, pi: (n, 0, pi)
        w_map = lambda n, oi, pi: (oi, 0)
        b_map = lambda n, oi, pi: (oi, 0)
        o_map = lambda n, oi, pi: (n, oi, pi)
    else:
        # oi innermost: the (larger) patches tile stays resident across the O sweep.
        grid = (N, p_tiles, o_tiles)
        p_map = lambda n, pi, oi: (n, 0, pi)
        w_map = lambda n, pi, oi: (oi, 0)
        b_map = lambda n, pi, oi: (oi, 0)
        o_map = lambda n, pi, oi: (n, oi, pi)

    need = derived_vmem(TP, TO)
    vmem_limit = int(min(VMEM_CAP, max(32 * 1024 * 1024, need + need // 2 + (2 << 20))))

    cost = pl.CostEstimate(
        flops=2 * N * O_pad * KKCp * P_pad,
        transcendentals=0,
        bytes_accessed=(N * KKCp * P_pad * in_sz * (1 if o_tiles == 1 else o_tiles)
                        + O_pad * KKCp * in_sz + O_pad * 4
                        + N * O_pad * P_pad * out_sz),
    )

    out = pl.pallas_call(
        _equal_conv2d_kernel,
        out_shape=jax.ShapeDtypeStruct((N, O_pad, P_pad), out_dtype),
        grid=grid,
        in_specs=[
            pl.BlockSpec((1, KKCp, TP), p_map),
            # NOTE: weight/bias block index is constant across the inner sweep;
            # pipeline_mode=pl.Buffered(1) would halve their VMEM share if needed.
            pl.BlockSpec((TO, KKCp), w_map),
            pl.BlockSpec((TO, 1), b_map),
        ],
        out_specs=pl.BlockSpec((1, TO, TP), o_map),
        compiler_params=pltpu.CompilerParams(
            dimension_semantics=("parallel", "parallel", "parallel"),
            vmem_limit_bytes=vmem_limit,
        ),
        cost_estimate=cost,
    )(patches, w2, b2)

    # Drop channel/spatial padding, restore NCHW.
    return out[:, :O, :P].reshape(N, O, Ho, Wo)


if __name__ == "__main__":
    key = jax.random.PRNGKey(0)
    kx, kw, kb = jax.random.split(key, 3)

    # Small shapes consistent with the module: N=2, C_in=4, C_out=8, 16x16, 3x3.
    N, C_in, C_out, H, W, K = 2, 4, 8, 16, 16, 3
    x = jax.random.normal(kx, (N, C_in, H, W), jnp.float32)
    # Module __init__: weight ~ randn(out, in, k, k); bias is a learnable param
    # (zeros at init) -- use non-zero values here to exercise the bias path.
    weight = jax.random.normal(kw, (C_out, C_in, K, K), jnp.float32)
    bias = 0.1 * jax.random.normal(kb, (C_out,), jnp.float32)

    def ref_conv(x, w, b, stride, padding, compute_dtype):
        scale = 1.0 / math.sqrt(x.shape[1] * w.shape[2] * w.shape[3])
        ws = (w.astype(jnp.float32) * scale).astype(compute_dtype)
        r = jax.lax.conv_general_dilated(
            x.astype(compute_dtype), ws, window_strides=(stride, stride),
            padding=((padding, padding), (padding, padding)),
            dimension_numbers=("NCHW", "OIHW", "NCHW"),
            preferred_element_type=jnp.float32)
        if b is not None:
            r = r + b.astype(jnp.float32)[None, :, None, None]
        return r.astype(x.dtype)

    # stride=1, padding=1 (typical StyleGAN2 3x3 conv) -- default bf16 operands.
    out = jax.block_until_ready(equal_conv2d(x, weight, bias, stride=1, padding=1))
    ref = ref_conv(x, weight, bias, 1, 1, jnp.bfloat16)
    assert out.shape == ref.shape, (out.shape, ref.shape)
    assert jnp.allclose(out, ref, rtol=1e-3, atol=1e-3), "mismatch (stride=1, bf16)"

    # stride=2, padding=1 (discriminator downsample path) -- default bf16 operands.
    out2 = jax.block_until_ready(equal_conv2d(x, weight, bias, stride=2, padding=1))
    ref2 = ref_conv(x, weight, bias, 2, 1, jnp.bfloat16)
    assert out2.shape == ref2.shape, (out2.shape, ref2.shape)
    assert jnp.allclose(out2, ref2, rtol=1e-3, atol=1e-3), "mismatch (stride=2, bf16)"

    # full-f32 compute path against f32 reference at tight tolerance.
    out3 = jax.block_until_ready(
        equal_conv2d(x, weight, bias, stride=1, padding=1, compute_dtype=jnp.float32))
    ref3 = ref_conv(x, weight, bias, 1, 1, jnp.float32)
    assert jnp.allclose(out3, ref3, rtol=1e-4, atol=1e-4), "mismatch (stride=1, f32)"

    print("KERNEL_OK")
</pallas_src>

<mosaic_0001>
module attributes {stable_mosaic.version = 11 : i64} {
  func.func @_equal_conv2d_kernel(%arg0: i32, %arg1: i32, %arg2: i32, %arg3: memref<1x48x256xbf16, #tpu.memory_space<vmem>>, %arg4: memref<8x48xbf16, #tpu.memory_space<vmem>>, %arg5: memref<8x1xf32, #tpu.memory_space<vmem>>, %arg6: memref<1x8x256xf32, #tpu.memory_space<vmem>>) attributes {dimension_semantics = [#tpu.dimension_semantics<parallel>, #tpu.dimension_semantics<parallel>, #tpu.dimension_semantics<parallel>], iteration_bounds = array<i64: 2, 1, 1>, scalar_prefetch = 0 : i64, scratch_operands = 0 : i64, tpu.core_type = #tpu.core_type<tc>, window_params = [{transform_indices = @transform_0, window_bounds = array<i64: 1, 48, 256>}, {transform_indices = @transform_1, window_bounds = array<i64: 8, 48>}, {transform_indices = @transform_2, window_bounds = array<i64: 8, 1>}, {transform_indices = @transform_3, window_bounds = array<i64: 1, 8, 256>}]} {
    %c0 = arith.constant 0 : index
    %c0_0 = arith.constant 0 : index
    %0 = vector.load %arg4[%c0, %c0_0] : memref<8x48xbf16, #tpu.memory_space<vmem>>, vector<8x48xbf16>
    %c0_1 = arith.constant 0 : index
    %c0_2 = arith.constant 0 : index
    %c0_3 = arith.constant 0 : index
    %1 = vector.load %arg3[%c0_1, %c0_2, %c0_3] : memref<1x48x256xbf16, #tpu.memory_space<vmem>>, vector<1x48x256xbf16>
    %2 = vector.shape_cast %1 : vector<1x48x256xbf16> to vector<48x256xbf16>
    %cst = arith.constant dense<0.000000e+00> : vector<8x256xf32>
    %3 = tpu.matmul %0, %2, %cst {dimension_numbers = #tpu.dot_dimension_numbers<[1], [0], [0], [1], [0, 0, 1, 1], [], []>} : vector<8x48xbf16>, vector<48x256xbf16>, vector<8x256xf32> -> vector<8x256xf32>
    %c0_4 = arith.constant 0 : index
    %c0_5 = arith.constant 0 : index
    %4 = vector.load %arg5[%c0_4, %c0_5] : memref<8x1xf32, #tpu.memory_space<vmem>>, vector<8x1xf32>
    %5 = vector.broadcast %4 : vector<8x1xf32> to vector<8x256xf32>
    %6 = arith.addf %3, %5 : vector<8x256xf32>
    %c0_6 = arith.constant 0 : index
    %c0_7 = arith.constant 0 : index
    %c0_8 = arith.constant 0 : index
    %7 = vector.load %arg6[%c0_6, %c0_7, %c0_8] : memref<1x8x256xf32, #tpu.memory_space<vmem>>, vector<1x8x256xf32>
    %8 = vector.shape_cast %7 : vector<1x8x256xf32> to vector<8x256xf32>
    %9 = vector.shape_cast %6 : vector<8x256xf32> to vector<1x8x256xf32>
    tpu.vector_store %arg6[%c0_6, %c0_7, %c0_8], %9 {strides = array<i32>} : memref<1x8x256xf32, #tpu.memory_space<vmem>>, vector<1x8x256xf32>,
    return
  }
  func.func @transform_0(%arg0: i32, %arg1: i32, %arg2: i32) -> (i32, i32, i32) {
    %c0_i32 = arith.constant 0 : i32
    %c0_i32_0 = arith.constant 0 : i32
    return %arg0, %c0_i32, %arg2 : i32, i32, i32
  }
  func.func @transform_1(%arg0: i32, %arg1: i32, %arg2: i32) -> (i32, i32) {
    %c0_i32 = arith.constant 0 : i32
    %c0_i32_0 = arith.constant 0 : i32
    return %arg1, %c0_i32 : i32, i32
  }
  func.func @transform_2(%arg0: i32, %arg1: i32, %arg2: i32) -> (i32, i32) {
    %c0_i32 = arith.constant 0 : i32
    %c0_i32_0 = arith.constant 0 : i32
    return %arg1, %c0_i32 : i32, i32
  }
  func.func @transform_3(%arg0: i32, %arg1: i32, %arg2: i32) -> (i32, i32, i32) {
    %c0_i32 = arith.constant 0 : i32
    return %arg0, %arg1, %arg2 : i32, i32, i32
  }
}

</mosaic_0001>

<llo_original>
// kernel: tpu_custom_call.1
$region0: #{tpu_custom_call.1}
  #allocation0 [shape = 'u32[]', space=smem, size = 0x4, offset = 0x4, fixed_abs, tag = 'smem constant byte address 0x4 - core index']
  #allocation1 [shape = 'u32[144,128]{1,0:T(1,128)}', space=vmem, size = 0x12000, scoped, tag = 'internal scratch']
  %s0 = inlined_call_operand.hbm [shape: bf16[2,48,256], index: 0, kind: input, shape index: {}]
  %s1 = inlined_call_operand.vmem [shape: bf16[8,48], index: 1, kind: input, shape index: {}]
  %s2 = inlined_call_operand.vmem [shape: f32[8,1], index: 2, kind: input, shape index: {}]
  %s3 = inlined_call_operand.hbm [shape: f32[2,8,256], index: 3, kind: output, shape index: {}]
  %s4 = sld [smem:[#allocation0]]
  $region49: #{tpu_custom_call.1} parent=0
    _
  %s6 = ssub.s32 1, %s4
  %s7 = scalar_select 0, %s6, %s4
  $region1: #{tpu_custom_call.1} parent=0
    #allocation2 [shape = 'u8[49152]{0}', space=vmem, size = 0xc000, scoped, tag = 'input window, operand 0']
    #allocation3 [shape = 's32[2]{0}', space=sflag, size = 0x8, scoped, tag = 'scoped memory for tpu_custom_call.1']
    #allocation4 [shape = 's32[2]{0}', space=sflag, size = 0x8, scoped, tag = 'scoped memory for tpu_custom_call.1']
    #allocation5 [shape = 'u8[16384]{0}', space=vmem, size = 0x4000, scoped, tag = 'output window, operand 0']
    %8 = vsyncpa [#allocation3], 0
    %s9 = scalar_lea.sflag [#allocation3], 1
    %10 = vsyncpa %s9, 0
    %11 = vsyncpa [#allocation4], 0
    %s12 = scalar_lea.sflag [#allocation4], 1
    %13 = vsyncpa %s12, 0
    loop: start=0, step=1, limit=4
    $region2: #{tpu_custom_call.1} parent=1 // loop_pre_header
      _
    $region3: #{tpu_custom_call.1} parent=1 // loop_header
      %s15 = sphi 0, %s19
      %p16 = scmp.ge.s32.totalorder %s15, 4
      %s22 = sphi 0, %s41
      %s23 = sphi 0, %s37
      %s24 = sphi 0, %s33
      %s25 = sphi 0, %s22
      %s26 = sphi 0, %s23
      %s27 = sphi 0, %s24
      %s28 = sphi 0, %s25
      %s29 = sphi 0, %s26
      %s30 = sphi 0, %s27
      %s46 = sphi 0, %s48
      %s49 = sphi 0, %s46
      %s50 = sphi 0, %s49
      %s66 = sphi 0, %s50
      %s72 = sphi 0, %s74
      %s75 = sphi 0, %s72
      %s76 = sphi 0, %s75
      %s92 = sphi 0, %s76
      %s98 = sphi 0, %s100
      %s101 = sphi 0, %s98
      %s102 = sphi 0, %s101
      %s118 = sphi 0, %s102
      %s128 = sphi 0, %s130
      %s131 = sphi 0, %s128
      %s132 = sphi 0, %s131
      %s148 = sphi 0, %s132
    $region4: #{tpu_custom_call.1} parent=1 // loop_header_branch
      %18 = sbr.rel (%p16) target = $region8
    $region5: #{tpu_custom_call.1} parent=1 // loop_body
      %s20 = ssub.s32 %s15, 1
      %s21 = ssub.s32 %s15, 2
      %s31 = sadd.s32 1, %s24
      %p32 = scmp.ge.s32.totalorder %s31, 1
      %s33 = scalar_select %p32, 0, %s31
      %s34 = sadd.s32 1, %s23
      %s35 = scalar_select %p32, %s34, %s23
      %p36 = scmp.ge.s32.totalorder %s35, 1
      %s37 = scalar_select %p36, 0, %s35
      %s38 = sadd.s32 1, %s22
      %s39 = scalar_select %p36, %s38, %s22
      %p40 = scmp.ge.s32.totalorder %s39, 2
      %s41 = scalar_select %p40, 0, %s39
      %s42 = ssub.s32 %s22, %s41
      %s43 = ssub.s32 %s24, %s33
      %s44 = sor.u32 %s42, %s43
      %p45 = scmp.eq.s32.totalorder %s44, 0
      %s47 = sadd.s32 %s46, 1
      %s48 = scalar_select %p45, %s46, %s47
      %p51 = pneg %p45
      %p52 = scmp.eq.s32.totalorder %s15, 1
      %p53 = por %p51, %p52
      %p54 = scmp.ne.s32.totalorder %s46, %s49
      %p55 = scmp.eq.s32.totalorder %s15, 0
      %p56 = por %p54, %p55
      %p57 = scmp.ne.s32.totalorder %s46, %s49
      %p58 = scmp.eq.s32.totalorder %s20, 1
      %p59 = por %p57, %p58
      %p60 = scmp.ne.s32.totalorder %s49, %s50
      %p61 = scmp.eq.s32.totalorder %s20, 0
      %p62 = por %p60, %p61
      %p63 = scmp.ne.s32.totalorder %s49, %s50
      %p64 = scmp.eq.s32.totalorder %s21, 1
      %p65 = por %p63, %p64
      %p67 = scmp.ne.s32.totalorder %s50, %s66
      %p68 = scmp.eq.s32.totalorder %s21, 0
      %p69 = por %p67, %p68
      %s70 = ssub.s32 %s23, %s37
      %p71 = scmp.eq.s32.totalorder %s70, 0
      %s73 = sadd.s32 %s72, 1
      %s74 = scalar_select %p71, %s72, %s73
      %p77 = pneg %p71
      %p78 = scmp.eq.s32.totalorder %s15, 1
      %p79 = por %p77, %p78
      %p80 = scmp.ne.s32.totalorder %s72, %s75
      %p81 = scmp.eq.s32.totalorder %s15, 0
      %p82 = por %p80, %p81
      %p83 = scmp.ne.s32.totalorder %s72, %s75
      %p84 = scmp.eq.s32.totalorder %s20, 1
      %p85 = por %p83, %p84
      %p86 = scmp.ne.s32.totalorder %s75, %s76
      %p87 = scmp.eq.s32.totalorder %s20, 0
      %p88 = por %p86, %p87
      %p89 = scmp.ne.s32.totalorder %s75, %s76
      %p90 = scmp.eq.s32.totalorder %s21, 1
      %p91 = por %p89, %p90
      %p93 = scmp.ne.s32.totalorder %s76, %s92
      %p94 = scmp.eq.s32.totalorder %s21, 0
      %p95 = por %p93, %p94
      %s96 = ssub.s32 %s23, %s37
      %p97 = scmp.eq.s32.totalorder %s96, 0
      %s99 = sadd.s32 %s98, 1
      %s100 = scalar_select %p97, %s98, %s99
      %p103 = pneg %p97
      %p104 = scmp.eq.s32.totalorder %s15, 1
      %p105 = por %p103, %p104
      %p106 = scmp.ne.s32.totalorder %s98, %s101
      %p107 = scmp.eq.s32.totalorder %s15, 0
      %p108 = por %p106, %p107
      %p109 = scmp.ne.s32.totalorder %s98, %s101
      %p110 = scmp.eq.s32.totalorder %s20, 1
      %p111 = por %p109, %p110
      %p112 = scmp.ne.s32.totalorder %s101, %s102
      %p113 = scmp.eq.s32.totalorder %s20, 0
      %p114 = por %p112, %p113
      %p115 = scmp.ne.s32.totalorder %s101, %s102
      %p116 = scmp.eq.s32.totalorder %s21, 1
      %p117 = por %p115, %p116
      %p119 = scmp.ne.s32.totalorder %s102, %s118
      %p120 = scmp.eq.s32.totalorder %s21, 0
      %p121 = por %p119, %p120
      %s122 = ssub.s32 %s22, %s41
      %s123 = ssub.s32 %s23, %s37
      %s124 = sor.u32 %s122, %s123
      %s125 = ssub.s32 %s24, %s33
      %s126 = sor.u32 %s124, %s125
      %p127 = scmp.eq.s32.totalorder %s126, 0
      %s129 = sadd.s32 %s128, 1
      %s130 = scalar_select %p127, %s128, %s129
      %p133 = pneg %p127
      %p134 = scmp.eq.s32.totalorder %s15, 1
      %p135 = por %p133, %p134
      %p136 = scmp.ne.s32.totalorder %s128, %s131
      %p137 = scmp.eq.s32.totalorder %s15, 0
      %p138 = por %p136, %p137
      %p139 = scmp.ne.s32.totalorder %s128, %s131
      %p140 = scmp.eq.s32.totalorder %s20, 1
      %p141 = por %p139, %p140
      %p142 = scmp.ne.s32.totalorder %s131, %s132
      %p143 = scmp.eq.s32.totalorder %s20, 0
      %p144 = por %p142, %p143
      %p145 = scmp.ne.s32.totalorder %s131, %s132
      %p146 = scmp.eq.s32.totalorder %s21, 1
      %p147 = por %p145, %p146
      %p149 = scmp.ne.s32.totalorder %s132, %s148
      %p150 = scmp.eq.s32.totalorder %s21, 0
      %p151 = por %p149, %p150
      %p152 = scmp.le.s32.totalorder 1, %s15
      %p153 = scmp.lt.s32.totalorder %s15, 3
      %p154 = pnand %p152, %p153
      %p155 = pneg %p154
      // Predicated region
      $region9: #{tpu_custom_call.1} parent=5 // pred_check
        _
      $region10: #{tpu_custom_call.1} parent=5 // pred_check_branch
        %157 = sbr.rel (%p154) target = $region12
      $region11: #{tpu_custom_call.1} parent=5 // pred_region
        %s158 = ssub.s32 %s15, 1
        // Predicated region
        $region13: #{tpu_custom_call.1} parent=11 // pred_check
          %p159 = pneg %p88
        $region14: #{tpu_custom_call.1} parent=11 // pred_check_branch
          %161 = sbr.rel (%p159) target = $region16
        $region15: #{tpu_custom_call.1} parent=11 // pred_region
          %p162 = scmp.lt.s32.totalorder %s26, 0
          %s163 = scalar_select %p162, %s26, 0
          %s164 = smul.addr %s163, 4
          %s165 = scalar_lea.vmem %s1, %s164
        $region16: #{tpu_custom_call.1} parent=11 // pred_fallthru
          _
        // Predicated region
        $region17: #{tpu_custom_call.1} parent=11 // pred_check
          %p166 = pneg %p114
        $region18: #{tpu_custom_call.1} parent=11 // pred_check_branch
          %168 = sbr.rel (%p166) target = $region20
        $region19: #{tpu_custom_call.1} parent=11 // pred_region
          %p169 = scmp.lt.s32.totalorder %s26, 0
          %s170 = scalar_select %p169, %s26, 0
          %s171 = smul.addr %s170, 8
          %s172 = scalar_lea.vmem %s2, %s171
        $region20: #{tpu_custom_call.1} parent=11 // pred_fallthru
          _
      $region12: #{tpu_custom_call.1} parent=5 // pred_fallthru
        _
      %p173 = scmp.lt.s32.totalorder %s15, 2
      // Predicated region
      $region21: #{tpu_custom_call.1} parent=5 // pred_check
        %p174 = pneg %p173
      $region22: #{tpu_custom_call.1} parent=5 // pred_check_branch
        %176 = sbr.rel (%p174) target = $region24
      $region23: #{tpu_custom_call.1} parent=5 // pred_region
        // Predicated region
        $region25: #{tpu_custom_call.1} parent=23 // pred_check
          %p177 = pneg %p56
        $region26: #{tpu_custom_call.1} parent=23 // pred_check_branch
          %179 = sbr.rel (%p177) target = $region28
        $region27: #{tpu_custom_call.1} parent=23 // pred_region
          %s180 = sand.u32 %s46, 1
          %s181 = scalar_lea.sflag [#allocation3], %s180
          %s182 = sand.u32 %s46, 1
          %s183 = smul.addr %s182, 48
          %s184 = scalar_lea.vmem [#allocation2], %s183
          %s185 = smul.u32 2, %s24
          %s187 = ssub.s32 768, 768
          %188 = vsyncadd %s181, %s187
          %s189 = smul.addr %s22, 12
          %s190 = sadd.s32 %s185, %s189
          %s191 = smul.addr %s190, 64
          %s192 = scalar_lea.hbm %s0, %s191
          %s193 = sshll.u32 %s184, 4
          %s194 = int_to_ptr.vmem [resolvable:$true] %s193
          %199 = dma.hbm_to_vmem [thread:$0]  %s192, 768, %s194, %s181, 128, 128, 8
        $region28: #{tpu_custom_call.1} parent=23 // pred_fallthru
          _
      $region24: #{tpu_custom_call.1} parent=5 // pred_fallthru
        _
      %p200 = scmp.le.s32.totalorder 1, %s15
      %p201 = scmp.lt.s32.totalorder %s15, 3
      %p202 = pnand %p200, %p201
      %p203 = pneg %p202
      // Predicated region
      $region29: #{tpu_custom_call.1} parent=5 // pred_check
        _
      $region30: #{tpu_custom_call.1} parent=5 // pred_check_branch
        %205 = sbr.rel (%p202) target = $region32
      $region31: #{tpu_custom_call.1} parent=5 // pred_region
        %s206 = ssub.s32 %s15, 1
        %s207 = sand.u32 %s49, 1
        %s208 = scalar_lea.sflag [#allocation3], %s207
        %s209 = sand.u32 %s49, 1
        %s210 = smul.addr %s209, 48
        %s211 = scalar_lea.vmem [#allocation2], %s210
        // Predicated region
        $region33: #{tpu_custom_call.1} parent=31 // pred_check
          %p212 = pneg %p62
        $region34: #{tpu_custom_call.1} parent=31 // pred_check_branch
          %214 = sbr.rel (%p212) target = $region36
        $region35: #{tpu_custom_call.1} parent=31 // pred_region
          %215 = dma.done %s208, 768
        $region36: #{tpu_custom_call.1} parent=31 // pred_fallthru
          _
        %s216 = sand.u32 %s49, 1
        %s217 = scalar_lea.sflag [#allocation3], %s216
        %s218 = sand.u32 %s49, 1
        %s219 = smul.addr %s218, 48
        %s220 = scalar_lea.vmem [#allocation2], %s219
        %p221 = pneg %p62
        %p222 = pneg %p59
        %p223 = scmp.lt.s32.totalorder %s26, 0
        %s224 = scalar_select %p223, %s26, 0
        %s225 = smul.addr %s224, 4
        %s226 = scalar_lea.vmem %s1, %s225
        %p227 = pneg %p88
        %p228 = pneg %p85
        %p229 = scmp.lt.s32.totalorder %s26, 0
        %s230 = scalar_select %p229, %s26, 0
        %s231 = smul.addr %s230, 8
        %s232 = scalar_lea.vmem %s2, %s231
        %p233 = pneg %p114
        %p234 = pneg %p111
        %p235 = pneg %p144
        %p236 = pneg %p141
        %s237 = sand.u32 %s131, 1
        %s238 = scalar_lea.sflag [#allocation4], %s237
        %s239 = sand.u32 %s131, 1
        %s240 = smul.addr %s239, 16
        %s241 = scalar_lea.vmem [#allocation5], %s240
        %s242 = smul.u32 2, %s27
        %p243 = scmp.lt.s32.totalorder %s26, 0
        %s244 = scalar_select %p243, %s26, 0
        %s245 = smul.addr %s244, 4
        %s246 = scalar_lea.vmem %s1, %s245
        %p247 = scmp.lt.s32.totalorder %s26, 0
        %s248 = scalar_select %p247, %s26, 0
        %s249 = smul.addr %s248, 8
        %s250 = scalar_lea.vmem %s2, %s249
        %s251 = smul.u32 2, %s27
        %v253 = vld [vmem:[%s246] sm:$0xf]
        %v254 = vld [vmem:[%s211] sm:$0xff]
        %v255 = vld [vmem:[%s211 + $0x8] sm:$0xff]
        %v256 = vld [vmem:[%s211 + $0x10] sm:$0xff]
        %v257 = vld [vmem:[%s211 + $0x18] sm:$0xff]
        %v258 = vld [vmem:[%s211 + $0x20] sm:$0xff]
        %v259 = vld [vmem:[%s211 + $0x28] sm:$0xff]
        %v260 = vld [vmem:[%s250] sm:$0xff]
        %262 = vset.pattern.permute.xlu0 0
        %263 = vperm.xlu0 %262, %v260
        %v264 = vpop.permute.xlu0 %263
        %v272 = vunpack.c.l.b16 %v254
        %v273 = vunpack.c.h.b16 %v254
        %v274 = vunpack.c.l.b16 %v255
        %v275 = vunpack.c.h.b16 %v255
        %v276 = vunpack.c.l.b16 %v256
        %v277 = vunpack.c.h.b16 %v256
        %v278 = vunpack.c.l.b16 %v257
        %v279 = vunpack.c.h.b16 %v257
        %v280 = vunpack.c.l.b16 %v258
        %v281 = vunpack.c.h.b16 %v258
        %v282 = vunpack.c.l.b16 %v259
        %v283 = vunpack.c.h.b16 %v259
        %v284 = vpack.c.b16 %v274, %v272
        %v285 = vpack.c.b16 %v275, %v273
        %v286 = vpack.c.b16 %v278, %v276
        %v287 = vpack.c.b16 %v279, %v277
        %v288 = vpack.c.b16 %v282, %v280
        %v289 = vpack.c.b16 %v283, %v281
        %vm296 = vcmask 392192
        %v298 = vsel %vm296, %v253, 0
        %300 = vmatprep.subr.bf16.mxu0 %v285
        %301 = vmatpush1.bf16.msra.mxu0 %v284
        %302 = vmatprep.subr.bf16.mxu0 %v287
        %303 = vmatpush1.bf16.msra.mxu0 %v286
        %304 = vmatprep.subr.bf16.mxu0 %v289
        %305 = vmatpush1.bf16.msra.mxu0 %v288
        %306 = vmatprep.subr.bf16.mxu0 0
        %307 = vmatpush1.bf16.msra.mxu0 0
        %308 = vmatprep.subr.bf16.mxu0 0
        %309 = vmatpush1.bf16.msra.mxu0 0
        %310 = vmatprep.subr.bf16.mxu0 0
        %311 = vmatpush1.bf16.msra.mxu0 0
        %312 = vmatprep.subr.bf16.mxu0 0
        %313 = vmatpush1.bf16.msra.mxu0 0
        %314 = vmatprep.subr.bf16.mxu0 0
        %315 = vmatpush1.bf16.msra.mxu0 0
        %316 = vmatprep.subr.bf16.mxu0 0
        %317 = vmatpush1.bf16.msra.mxu0 0
        %318 = vmatprep.subr.bf16.mxu0 0
        %319 = vmatpush1.bf16.msra.mxu0 0
        %320 = vmatprep.subr.bf16.mxu0 0
        %321 = vmatpush1.bf16.msra.mxu0 0
        %322 = vmatprep.subr.bf16.mxu0 0
        %323 = vmatpush1.bf16.msra.mxu0 0
        %324 = vmatprep.subr.bf16.mxu0 0
        %325 = vmatpush1.bf16.msra.mxu0 0
        %326 = vmatprep.subr.bf16.mxu0 0
        %327 = vmatpush1.bf16.msra.mxu0 0
        %328 = vmatprep.subr.bf16.mxu0 0
        %329 = vmatpush1.bf16.msra.mxu0 0
        %330 = vmatprep.subr.bf16.mxu0 0
        %331 = vmatpush1.bf16.msra.mxu0 0
        %332 = vmatprep.mubr.bf16.mxu0 0
        %333 = vmatmul.mubr.bf16.gmra.mrb[0].mxu0 %v298
        %v334 = vpop.f32.mrb[0].mxu0
        %v335 = vadd.f32 %v264, %v334
        %v336 = vpop.f32.mrb[0].mxu0
        %v337 = vadd.f32 %v264, %v336
        %v338 = vpop.f32.mrb[0].mxu0
        %v339 = vpop.f32.mrb[0].mxu0
        %340 = vdwg.mxu0
        %341 = vst [vmem:[%s241] sm:$0xff] %v335
        %342 = vst [vmem:[%s241 + $0x8] sm:$0xff] %v337
        %s343 = sand.u32 %s131, 1
        %s344 = scalar_lea.sflag [#allocation4], %s343
        %s345 = sand.u32 %s131, 1
        %s346 = smul.addr %s345, 16
        %s347 = scalar_lea.vmem [#allocation5], %s346
        // Predicated region
        $region37: #{tpu_custom_call.1} parent=31 // pred_check
          %p348 = pneg %p141
        $region38: #{tpu_custom_call.1} parent=31 // pred_check_branch
          %350 = sbr.rel (%p348) target = $region40
        $region39: #{tpu_custom_call.1} parent=31 // pred_region
          %s351 = smul.u32 2, %s27
          %s353 = ssub.s32 256, 256
          %354 = vsyncadd %s344, %s353
          %s355 = smul.addr %s26, 2
          %s356 = sadd.s32 %s351, %s355
          %s357 = smul.addr %s25, 2
          %s358 = sadd.s32 %s356, %s357
          %s359 = smul.addr %s358, 128
          %s360 = scalar_lea.hbm %s3, %s359
          %s362 = sshll.u32 %s347, 4
          %s363 = int_to_ptr.vmem [resolvable:$true] %s362
          %365 = dma.vmem_to_hbm [thread:$0]  %s363, 256, %s360, %s344
        $region40: #{tpu_custom_call.1} parent=31 // pred_fallthru
          _
      $region32: #{tpu_custom_call.1} parent=5 // pred_fallthru
        _
      %p366 = scmp.le.s32.totalorder 2, %s15
      // Predicated region
      $region41: #{tpu_custom_call.1} parent=5 // pred_check
        %p367 = pneg %p366
      $region42: #{tpu_custom_call.1} parent=5 // pred_check_branch
        %369 = sbr.rel (%p367) target = $region44
      $region43: #{tpu_custom_call.1} parent=5 // pred_region
        %s370 = ssub.s32 %s15, 2
        // Predicated region
        $region45: #{tpu_custom_call.1} parent=43 // pred_check
          %p371 = pneg %p147
        $region46: #{tpu_custom_call.1} parent=43 // pred_check_branch
          %373 = sbr.rel (%p371) target = $region48
        $region47: #{tpu_custom_call.1} parent=43 // pred_region
          %s374 = sand.u32 %s132, 1
          %s375 = scalar_lea.sflag [#allocation4], %s374
          %s376 = sand.u32 %s132, 1
          %s377 = smul.addr %s376, 16
          %s378 = scalar_lea.vmem [#allocation5], %s377
          %379 = dma.done %s375, 256
        $region48: #{tpu_custom_call.1} parent=43 // pred_fallthru
          _
      $region44: #{tpu_custom_call.1} parent=5 // pred_fallthru
        _
    $region6: #{tpu_custom_call.1} parent=1 // loop_footer
      %s19 = sadd.s32 1, %s15
    $region7: #{tpu_custom_call.1} parent=1 // loop_footer_branch
      %14 = sbr.rel target = $region3
    $region8: #{tpu_custom_call.1} parent=1 // loop_exit
      _
    %380 = vsyncpa [#allocation3], 1
    %s381 = scalar_lea.sflag [#allocation3], 1
    %382 = vsyncpa %s381, 1
    %383 = vsyncpa [#allocation4], 1
    %s384 = scalar_lea.sflag [#allocation4], 1
    %385 = vsyncpa %s384, 1

</llo_original>
